<compile_context>
chip_gen: v5e
topology: v5e:2x2
jax: 0.10.0
libtpu: 0.0.40
codegen_flags: <defaults>
</compile_context>

<pallas_src>
import functools

import jax
import jax.numpy as jnp
from jax.experimental import pallas as pl
from jax.experimental.pallas import tpu as pltpu


def _cdiv(a, b):
    return (a + b - 1) // b


def _round_up(a, b):
    return _cdiv(a, b) * b


def _device_tuning():
    """Return (tile_byte_budget, vmem_limit_bytes, default_splits, use_core_parallel)."""
    try:
        kind = jax.devices()[0].device_kind.lower()
    except Exception:
        kind = ""
    if "v7" in kind or "7x" in kind:
        # v7x: 64 MiB physical / 32 MiB scoped VMEM, 2 TensorCores per chip.
        return 2 << 20, 32 << 20, 2, True
    if "lite" in kind or "v5e" in kind or "v6" in kind:
        # v5e / v6e: 128 MiB VMEM, a single TensorCore -> no batch split.
        return 4 << 20, 64 << 20, 1, False
    # v4 / v5p (megacore) or unknown chip: conservative tile, 2-way "parallel".
    return 2 << 20, 32 << 20, 2, False


def _cross_entropy_kernel(x_ref, y_ref, out_ref, acc_ref, *, n_total, tn,
                          n_classes, tiles_per_split):
    s = pl.program_id(0)            # batch split (per TensorCore on v7x)
    t = pl.program_id(1)            # batch tile within the split (reduction axis)
    n_t = pl.num_programs(1)

    @pl.when(t == 0)
    def _init():
        acc_ref[...] = jnp.zeros_like(acc_ref)

    x = x_ref[...]                              # [TN, C], native dtype
    y = y_ref[...]                              # [TN, 1] int32 class indices

    # Row max + shift in the native dtype (bf16 VALU on v6e/v7x).  xm is reused
    # for both the exp-sum and the target gather (the max terms cancel exactly).
    m = jnp.max(x, axis=-1, keepdims=True)                                  # [TN, 1]
    xm = x - m                                                              # [TN, C]

    # Gather xm[i, y_i] via a lane-iota select (exactly one hit per row, so the
    # native-dtype row sum is exact); no dynamic gather / one-hot matmul.
    col = jax.lax.broadcasted_iota(jnp.int32, (tn, n_classes), 1)
    tgt = jnp.sum(jnp.where(col == y, xm, jnp.zeros((), x.dtype)),
                  axis=-1, keepdims=True).astype(jnp.float32)               # [TN, 1]

    # Shifted log-sum-exp in f32 (exp/log run on the EUP slot).
    lse = jnp.log(jnp.sum(jnp.exp(xm.astype(jnp.float32)),
                          axis=-1, keepdims=True))                          # [TN, 1]

    # Mask rows past the true batch size (partial edge tile, clamped duplicate
    # tiles); keep this a select so garbage rows can never propagate.
    row_start = (s * tiles_per_split + t) * tn
    row = row_start + jax.lax.broadcasted_iota(jnp.int32, (tn, 1), 0)
    contrib = jnp.where(row < n_total, lse - tgt, 0.0)                      # [TN, 1]

    # Per-row vector accumulator; scalar reduce + 1/N happen only in finalize.
    acc_ref[...] += contrib

    @pl.when(t == n_t - 1)
    def _finalize():
        out_ref[0] = (jnp.sum(acc_ref[...], keepdims=True)
                      * jnp.float32(1.0 / n_total))


def yate_contrast_tf_loss(x, y, *, n_splits=None, tile_rows=None,
                          core_parallel=None):
    """x: [N, C] float logits (any float dtype), y: [N] int class indices -> f32 scalar."""
    n, c = x.shape
    y2 = y.astype(jnp.int32).reshape(n, 1)
    itemsize = jnp.dtype(x.dtype).itemsize

    tile_bytes, vmem_limit, default_splits, dev_core_parallel = _device_tuning()
    if n_splits is None:
        n_splits = default_splits
    if core_parallel is None:
        core_parallel = dev_core_parallel

    # Sublane packing multiple of the input dtype (f32 -> 8, bf16 -> 16, i8 -> 32).
    sub = max(8, 32 // max(1, itemsize))
    # Rows occupy ceil(C/128)*128 lanes in VMEM regardless of C, so budget the
    # tile on the lane-padded row size (the f32 temporaries scale the same way).
    c_pad = _round_up(c, 128)
    if tile_rows is None:
        tn = (tile_bytes // max(1, c_pad * itemsize)) // sub * sub
    else:
        tn = _round_up(int(tile_rows), sub)
    tn = int(min(max(tn, sub), 16384, _round_up(n, sub)))

    tiles_total = _cdiv(n, tn)
    n_splits_eff = max(1, min(int(n_splits), tiles_total))
    tiles_per_split = _cdiv(tiles_total, n_splits_eff)
    last_block = tiles_total - 1

    if n_splits_eff > 1:
        split_sem = pltpu.CORE_PARALLEL if core_parallel else pltpu.PARALLEL
    else:
        split_sem = pltpu.ARBITRARY

    def in_map(s, t):
        # Clamp so duplicated tail tiles stay in-bounds; their rows are masked out.
        return (jnp.minimum(s * tiles_per_split + t, last_block), 0)

    kernel = functools.partial(
        _cross_entropy_kernel,
        n_total=n, tn=tn, n_classes=c, tiles_per_split=tiles_per_split)

    partials = pl.pallas_call(
        kernel,
        out_shape=jax.ShapeDtypeStruct((n_splits_eff, 1, 1), jnp.float32),
        grid=(n_splits_eff, tiles_per_split),
        in_specs=[
            pl.BlockSpec((tn, c), in_map),      # logits tile, streamed in native dtype
            pl.BlockSpec((tn, 1), in_map),      # target-index tile
        ],
        out_specs=pl.BlockSpec((1, 1, 1), lambda s, t: (s, 0, 0)),
        scratch_shapes=[pltpu.VMEM((tn, 1), jnp.float32)],
        compiler_params=pltpu.CompilerParams(
            dimension_semantics=(split_sem, pltpu.ARBITRARY),
            vmem_limit_bytes=vmem_limit,
        ),
        cost_estimate=pl.CostEstimate(
            flops=int(6 * n * c),
            transcendentals=int(n * c + n),
            bytes_accessed=int(n * c * itemsize + n * 4 + n_splits_eff * 4),
        ),
    )(x, y2)

    # Each split is already divided by the global N; partial sums add to the mean.
    return jnp.sum(partials)


if __name__ == "__main__":
    # Small deterministic example: 20 samples x 32 classes (N deliberately not a
    # multiple of the test tile size so the masking / split / clamp paths run).
    N, C = 20, 32
    key = jax.random.PRNGKey(0)
    kx, ky = jax.random.split(key)
    x = jax.random.normal(kx, (N, C), dtype=jnp.float32)
    y = jax.random.randint(ky, (N,), 0, C, dtype=jnp.int32)

    # reference: PyTorch nn.CrossEntropyLoss (mean reduction) in pure JAX
    lse = jax.scipy.special.logsumexp(x, axis=-1)
    ref = jnp.mean(lse - x[jnp.arange(N), y])

    # tiny tiles + forced 2-way split -> multi-tile, multi-split, clamped-tail path
    # (core_parallel=False so this path is valid on single-TensorCore chips too)
    loss = yate_contrast_tf_loss(x, y, tile_rows=8, n_splits=2, core_parallel=False)
    jax.block_until_ready(loss)
    assert jnp.allclose(loss, ref, atol=1e-5, rtol=1e-5), (loss, ref)

    # default device-tuned config: single partial-tile path
    loss2 = yate_contrast_tf_loss(x, y)
    jax.block_until_ready(loss2)
    assert jnp.allclose(loss2, ref, atol=1e-5, rtol=1e-5), (loss2, ref)

    print("KERNEL_OK")
</pallas_src>

<mosaic_0001>
module attributes {stable_mosaic.version = 11 : i64} {
  func.func @_cross_entropy_kernel(%arg0: i32, %arg1: i32, %arg2: memref<8x32xf32, #tpu.memory_space<vmem>>, %arg3: memref<8x1xi32, #tpu.memory_space<vmem>>, %arg4: memref<1x1x1xf32, #tpu.memory_space<vmem>>, %arg5: memref<8x1xf32, #tpu.memory_space<vmem>>) attributes {dimension_semantics = [#tpu.dimension_semantics<parallel>, #tpu.dimension_semantics<arbitrary>], iteration_bounds = array<i64: 2, 2>, scalar_prefetch = 0 : i64, scratch_operands = 1 : i64, tpu.core_type = #tpu.core_type<tc>, window_params = [{transform_indices = @transform_0, window_bounds = array<i64: 8, 32>}, {transform_indices = @transform_1, window_bounds = array<i64: 8, 1>}, {transform_indices = @transform_2, window_bounds = array<i64: 1, 1, 1>}]} {
    %c0_i32 = arith.constant 0 : i32
    %0 = arith.cmpi eq, %arg1, %c0_i32 : i32
    %1 = arith.extui %0 : i1 to i32
    %c0_i32_0 = arith.constant 0 : i32
    %2 = arith.cmpi ne, %1, %c0_i32_0 : i32
    scf.if %2 {
      %cst_13 = arith.constant 0.000000e+00 : f32
      %37 = vector.broadcast %cst_13 : f32 to vector<8x1xf32>
      %c0_14 = arith.constant 0 : index
      %c0_15 = arith.constant 0 : index
      %38 = vector.load %arg5[%c0_14, %c0_15] : memref<8x1xf32, #tpu.memory_space<vmem>>, vector<8x1xf32>
      tpu.vector_store %arg5[%c0_14, %c0_15], %37 {strides = array<i32>} : memref<8x1xf32, #tpu.memory_space<vmem>>, vector<8x1xf32>,
    } else {
    }
    %c0 = arith.constant 0 : index
    %c0_1 = arith.constant 0 : index
    %3 = vector.load %arg2[%c0, %c0_1] : memref<8x32xf32, #tpu.memory_space<vmem>>, vector<8x32xf32>
    %c0_2 = arith.constant 0 : index
    %c0_3 = arith.constant 0 : index
    %4 = vector.load %arg3[%c0_2, %c0_3] : memref<8x1xi32, #tpu.memory_space<vmem>>, vector<8x1xi32>
    %cst = arith.constant dense<0xFF800000> : vector<8xf32>
    %5 = vector.multi_reduction <maximumf>, %3, %cst [1] : vector<8x32xf32> to vector<8xf32>
    %6 = vector.shape_cast %5 : vector<8xf32> to vector<8x1xf32>
    %7 = vector.broadcast %6 : vector<8x1xf32> to vector<8x32xf32>
    %8 = arith.subf %3, %7 : vector<8x32xf32>
    %9 = tpu.iota {dimensions = array<i32: 1>} : vector<8x32xi32>
    %10 = vector.broadcast %4 : vector<8x1xi32> to vector<8x32xi32>
    %11 = arith.cmpi eq, %9, %10 : vector<8x32xi32>
    %cst_4 = arith.constant 0.000000e+00 : f32
    %12 = vector.broadcast %cst_4 : f32 to vector<8x32xf32>
    %13 = arith.select %11, %8, %12 : vector<8x32xi1>, vector<8x32xf32>
    %cst_5 = arith.constant dense<0.000000e+00> : vector<8xf32>
    %14 = vector.multi_reduction <add>, %13, %cst_5 [1] : vector<8x32xf32> to vector<8xf32>
    %15 = vector.shape_cast %14 : vector<8xf32> to vector<8x1xf32>
    %16 = math.exp %8 : vector<8x32xf32>
    %cst_6 = arith.constant dense<0.000000e+00> : vector<8xf32>
    %17 = vector.multi_reduction <add>, %16, %cst_6 [1] : vector<8x32xf32> to vector<8xf32>
    %18 = vector.shape_cast %17 : vector<8xf32> to vector<8x1xf32>
    %19 = math.log %18 : vector<8x1xf32>
    %c2_i32 = arith.constant 2 : i32
    %20 = arith.muli %arg0, %c2_i32 : i32
    %21 = arith.addi %20, %arg1 : i32
    %c8_i32 = arith.constant 8 : i32
    %22 = arith.muli %21, %c8_i32 : i32
    %23 = tpu.iota {dimensions = array<i32: 0>} : vector<8x1xi32>
    %24 = vector.broadcast %22 : i32 to vector<8x1xi32>
    %25 = arith.addi %24, %23 : vector<8x1xi32>
    %c20_i32 = arith.constant 20 : i32
    %26 = vector.broadcast %c20_i32 : i32 to vector<8x1xi32>
    %27 = arith.cmpi slt, %25, %26 : vector<8x1xi32>
    %28 = arith.subf %19, %15 : vector<8x1xf32>
    %cst_7 = arith.constant 0.000000e+00 : f32
    %29 = vector.broadcast %cst_7 : f32 to vector<8x1xf32>
    %30 = arith.select %27, %28, %29 : vector<8x1xi1>, vector<8x1xf32>
    %c0_8 = arith.constant 0 : index
    %c0_9 = arith.constant 0 : index
    %31 = vector.load %arg5[%c0_8, %c0_9] : memref<8x1xf32, #tpu.memory_space<vmem>>, vector<8x1xf32>
    %32 = arith.addf %31, %30 : vector<8x1xf32>
    %c0_10 = arith.constant 0 : index
    %c0_11 = arith.constant 0 : index
    %33 = vector.load %arg5[%c0_10, %c0_11] : memref<8x1xf32, #tpu.memory_space<vmem>>, vector<8x1xf32>
    tpu.vector_store %arg5[%c0_10, %c0_11], %32 {strides = array<i32>} : memref<8x1xf32, #tpu.memory_space<vmem>>, vector<8x1xf32>,
    %c1_i32 = arith.constant 1 : i32
    %34 = arith.cmpi eq, %arg1, %c1_i32 : i32
    %35 = arith.extui %34 : i1 to i32
    %c0_i32_12 = arith.constant 0 : i32
    %36 = arith.cmpi ne, %35, %c0_i32_12 : i32
    scf.if %36 {
      %c0_13 = arith.constant 0 : index
      %c0_14 = arith.constant 0 : index
      %37 = vector.load %arg5[%c0_13, %c0_14] : memref<8x1xf32, #tpu.memory_space<vmem>>, vector<8x1xf32>
      %38 = vector.shape_cast %37 : vector<8x1xf32> to vector<1x8x1xf32>
      %cst_15 = arith.constant dense<0.000000e+00> : vector<1xf32>
      %39 = vector.multi_reduction <add>, %38, %cst_15 [1, 2] : vector<1x8x1xf32> to vector<1xf32>
      %40 = vector.shape_cast %39 : vector<1xf32> to vector<1x1x1xf32>
      %41 = vector.extract %40[0, 0, 0] : f32 from vector<1x1x1xf32>
      %42 = vector.broadcast %41 : f32 to vector<1x1xf32>
      %cst_16 = arith.constant 5.000000e-02 : f32
      %43 = vector.broadcast %cst_16 : f32 to vector<1x1xf32>
      %44 = arith.mulf %42, %43 : vector<1x1xf32>
      %c0_17 = arith.constant 0 : index
      %c0_18 = arith.constant 0 : index
      %c0_19 = arith.constant 0 : index
      %45 = vector.load %arg4[%c0_17, %c0_18, %c0_19] : memref<1x1x1xf32, #tpu.memory_space<vmem>>, vector<1x1x1xf32>
      %46 = vector.shape_cast %45 : vector<1x1x1xf32> to vector<1x1xf32>
      %47 = vector.shape_cast %44 : vector<1x1xf32> to vector<1x1x1xf32>
      tpu.vector_store %arg4[%c0_17, %c0_18, %c0_19], %47 {strides = array<i32>} : memref<1x1x1xf32, #tpu.memory_space<vmem>>, vector<1x1x1xf32>,
    } else {
    }
    return
  }
  func.func @transform_0(%arg0: i32, %arg1: i32) -> (i32, i32) {
    %c2_i32 = arith.constant 2 : i32
    %0 = arith.muli %arg0, %c2_i32 : i32
    %1 = arith.addi %0, %arg1 : i32
    %c2_i32_0 = arith.constant 2 : i32
    %2 = arith.minsi %1, %c2_i32_0 : i32
    %c0_i32 = arith.constant 0 : i32
    %c0_i32_1 = arith.constant 0 : i32
    return %2, %c0_i32 : i32, i32
  }
  func.func @transform_1(%arg0: i32, %arg1: i32) -> (i32, i32) {
    %c2_i32 = arith.constant 2 : i32
    %0 = arith.muli %arg0, %c2_i32 : i32
    %1 = arith.addi %0, %arg1 : i32
    %c2_i32_0 = arith.constant 2 : i32
    %2 = arith.minsi %1, %c2_i32_0 : i32
    %c0_i32 = arith.constant 0 : i32
    %c0_i32_1 = arith.constant 0 : i32
    return %2, %c0_i32 : i32, i32
  }
  func.func @transform_2(%arg0: i32, %arg1: i32) -> (i32, i32, i32) {
    %c0_i32 = arith.constant 0 : i32
    %c0_i32_0 = arith.constant 0 : i32
    %c0_i32_1 = arith.constant 0 : i32
    return %arg0, %c0_i32, %c0_i32_0 : i32, i32, i32
  }
}

</mosaic_0001>

<llo_original>
// kernel: tpu_custom_call.1
$region0: #{tpu_custom_call.1}
  #allocation0 [shape = 'u32[]', space=smem, size = 0x4, offset = 0x4, fixed_abs, tag = 'smem constant byte address 0x4 - core index']
  #allocation1 [shape = 'u32[72,128]{1,0:T(1,128)}', space=vmem, size = 0x9000, scoped, tag = 'internal scratch']
  #allocation2 [shape = 'f32[8,1]{1,0:T(8,128)}', space=vmem, size = 0x1000, scoped, tag = 'scratch operand']
  %s0 = inlined_call_operand.vmem [shape: f32[20,32], index: 0, kind: input, shape index: {}]
  %s1 = inlined_call_operand.vmem [shape: s32[20,1], index: 1, kind: input, shape index: {}]
  %s2 = inlined_call_operand.vmem [shape: f32[2,1,1], index: 2, kind: output, shape index: {}]
  %s3 = sld [smem:[#allocation0]]
  $region49: #{tpu_custom_call.1} parent=0
    _
  %s5 = ssub.s32 1, %s3
  %s6 = scalar_select 0, %s5, %s3
  loop: start=0, step=1, limit=6
  $region2: #{tpu_custom_call.1} parent=0 // loop_pre_header
    _
  $region3: #{tpu_custom_call.1} parent=0 // loop_header
    %s8 = sphi 0, %s12
    %p9 = scmp.ge.s32.totalorder %s8, 6
    %s15 = sphi 0, %s27
    %s16 = sphi 0, %s23
    %s17 = sphi 0, %s15
    %s18 = sphi 0, %s16
    %s19 = sphi 0, %s17
    %s20 = sphi 0, %s18
    %s38 = sphi 0, %s40
    %s41 = sphi 0, %s38
    %s42 = sphi 0, %s41
    %s58 = sphi 0, %s42
    %s72 = sphi 0, %s74
    %s75 = sphi 0, %s72
    %s76 = sphi 0, %s75
    %s92 = sphi 0, %s76
    %s98 = sphi 0, %s100
    %s101 = sphi 0, %s98
    %s102 = sphi 0, %s101
    %s118 = sphi 0, %s102
  $region4: #{tpu_custom_call.1} parent=0 // loop_header_branch
    %11 = sbr.rel (%p9) target = $region8
  $region5: #{tpu_custom_call.1} parent=0 // loop_body
    %s13 = ssub.s32 %s8, 1
    %s14 = ssub.s32 %s8, 2
    %s21 = sadd.s32 1, %s16
    %p22 = scmp.ge.s32.totalorder %s21, 2
    %s23 = scalar_select %p22, 0, %s21
    %s24 = sadd.s32 1, %s15
    %s25 = scalar_select %p22, %s24, %s15
    %p26 = scmp.ge.s32.totalorder %s25, 2
    %s27 = scalar_select %p26, 0, %s25
    %s28 = smul.u32 %s15, 2
    %s29 = sadd.s32 %s28, %s16
    %p30 = scmp.lt.s32.totalorder %s29, 2
    %s31 = scalar_select %p30, %s29, 2
    %s32 = smul.u32 %s27, 2
    %s33 = sadd.s32 %s32, %s23
    %p34 = scmp.lt.s32.totalorder %s33, 2
    %s35 = scalar_select %p34, %s33, 2
    %s36 = ssub.s32 %s31, %s35
    %p37 = scmp.eq.s32.totalorder %s36, 0
    %s39 = sadd.s32 %s38, 1
    %s40 = scalar_select %p37, %s38, %s39
    %p43 = pneg %p37
    %p44 = scmp.eq.s32.totalorder %s8, 3
    %p45 = por %p43, %p44
    %p46 = scmp.ne.s32.totalorder %s38, %s41
    %p47 = scmp.eq.s32.totalorder %s8, 0
    %p48 = por %p46, %p47
    %p49 = scmp.ne.s32.totalorder %s38, %s41
    %p50 = scmp.eq.s32.totalorder %s13, 3
    %p51 = por %p49, %p50
    %p52 = scmp.ne.s32.totalorder %s41, %s42
    %p53 = scmp.eq.s32.totalorder %s13, 0
    %p54 = por %p52, %p53
    %p55 = scmp.ne.s32.totalorder %s41, %s42
    %p56 = scmp.eq.s32.totalorder %s14, 3
    %p57 = por %p55, %p56
    %p59 = scmp.ne.s32.totalorder %s42, %s58
    %p60 = scmp.eq.s32.totalorder %s14, 0
    %p61 = por %p59, %p60
    %s62 = smul.u32 %s15, 2
    %s63 = sadd.s32 %s62, %s16
    %p64 = scmp.lt.s32.totalorder %s63, 2
    %s65 = scalar_select %p64, %s63, 2
    %s66 = smul.u32 %s27, 2
    %s67 = sadd.s32 %s66, %s23
    %p68 = scmp.lt.s32.totalorder %s67, 2
    %s69 = scalar_select %p68, %s67, 2
    %s70 = ssub.s32 %s65, %s69
    %p71 = scmp.eq.s32.totalorder %s70, 0
    %s73 = sadd.s32 %s72, 1
    %s74 = scalar_select %p71, %s72, %s73
    %p77 = pneg %p71
    %p78 = scmp.eq.s32.totalorder %s8, 3
    %p79 = por %p77, %p78
    %p80 = scmp.ne.s32.totalorder %s72, %s75
    %p81 = scmp.eq.s32.totalorder %s8, 0
    %p82 = por %p80, %p81
    %p83 = scmp.ne.s32.totalorder %s72, %s75
    %p84 = scmp.eq.s32.totalorder %s13, 3
    %p85 = por %p83, %p84
    %p86 = scmp.ne.s32.totalorder %s75, %s76
    %p87 = scmp.eq.s32.totalorder %s13, 0
    %p88 = por %p86, %p87
    %p89 = scmp.ne.s32.totalorder %s75, %s76
    %p90 = scmp.eq.s32.totalorder %s14, 3
    %p91 = por %p89, %p90
    %p93 = scmp.ne.s32.totalorder %s76, %s92
    %p94 = scmp.eq.s32.totalorder %s14, 0
    %p95 = por %p93, %p94
    %s96 = ssub.s32 %s15, %s27
    %p97 = scmp.eq.s32.totalorder %s96, 0
    %s99 = sadd.s32 %s98, 1
    %s100 = scalar_select %p97, %s98, %s99
    %p103 = pneg %p97
    %p104 = scmp.eq.s32.totalorder %s8, 3
    %p105 = por %p103, %p104
    %p106 = scmp.ne.s32.totalorder %s98, %s101
    %p107 = scmp.eq.s32.totalorder %s8, 0
    %p108 = por %p106, %p107
    %p109 = scmp.ne.s32.totalorder %s98, %s101
    %p110 = scmp.eq.s32.totalorder %s13, 3
    %p111 = por %p109, %p110
    %p112 = scmp.ne.s32.totalorder %s101, %s102
    %p113 = scmp.eq.s32.totalorder %s13, 0
    %p114 = por %p112, %p113
    %p115 = scmp.ne.s32.totalorder %s101, %s102
    %p116 = scmp.eq.s32.totalorder %s14, 3
    %p117 = por %p115, %p116
    %p119 = scmp.ne.s32.totalorder %s102, %s118
    %p120 = scmp.eq.s32.totalorder %s14, 0
    %p121 = por %p119, %p120
    %p122 = scmp.le.s32.totalorder 1, %s8
    %p123 = scmp.lt.s32.totalorder %s8, 5
    %p124 = pnand %p122, %p123
    %p125 = pneg %p124
    // Predicated region
    $region9: #{tpu_custom_call.1} parent=5 // pred_check
      _
    $region10: #{tpu_custom_call.1} parent=5 // pred_check_branch
      %127 = sbr.rel (%p124) target = $region12
    $region11: #{tpu_custom_call.1} parent=5 // pred_region
      %s128 = ssub.s32 %s8, 1
    $region12: #{tpu_custom_call.1} parent=5 // pred_fallthru
      _
    %p129 = scmp.lt.s32.totalorder %s8, 4
    // Predicated region
    $region13: #{tpu_custom_call.1} parent=5 // pred_check
      %p130 = pneg %p129
    $region14: #{tpu_custom_call.1} parent=5 // pred_check_branch
      %132 = sbr.rel (%p130) target = $region16
    $region15: #{tpu_custom_call.1} parent=5 // pred_region
      // Predicated region
      $region17: #{tpu_custom_call.1} parent=15 // pred_check
        %p133 = pneg %p48
      $region18: #{tpu_custom_call.1} parent=15 // pred_check_branch
        %135 = sbr.rel (%p133) target = $region20
      $region19: #{tpu_custom_call.1} parent=15 // pred_region
        %s136 = smul.u32 %s15, 2
        %s137 = sadd.s32 %s136, %s16
        %p138 = scmp.lt.s32.totalorder %s137, 2
        %s139 = scalar_select %p138, %s137, 2
        %p140 = scmp.lt.s32.totalorder %s139, 2
        %s141 = scalar_select %p140, %s139, 2
        %s142 = smul.addr %s141, 8
        %s143 = scalar_lea.vmem %s0, %s142
        %s144 = smul.u32 %s15, 2
        %s145 = sadd.s32 %s144, %s16
        %p146 = scmp.lt.s32.totalorder %s145, 2
        %s147 = scalar_select %p146, %s145, 2
      $region20: #{tpu_custom_call.1} parent=15 // pred_fallthru
        _
      // Predicated region
      $region21: #{tpu_custom_call.1} parent=15 // pred_check
        %p148 = pneg %p82
      $region22: #{tpu_custom_call.1} parent=15 // pred_check_branch
        %150 = sbr.rel (%p148) target = $region24
      $region23: #{tpu_custom_call.1} parent=15 // pred_region
        %s151 = smul.u32 %s15, 2
        %s152 = sadd.s32 %s151, %s16
        %p153 = scmp.lt.s32.totalorder %s152, 2
        %s154 = scalar_select %p153, %s152, 2
        %p155 = scmp.lt.s32.totalorder %s154, 2
        %s156 = scalar_select %p155, %s154, 2
        %s157 = smul.addr %s156, 8
        %s158 = scalar_lea.vmem %s1, %s157
        %s159 = smul.u32 %s15, 2
        %s160 = sadd.s32 %s159, %s16
        %p161 = scmp.lt.s32.totalorder %s160, 2
        %s162 = scalar_select %p161, %s160, 2
      $region24: #{tpu_custom_call.1} parent=15 // pred_fallthru
        _
    $region16: #{tpu_custom_call.1} parent=5 // pred_fallthru
      _
    %p163 = scmp.le.s32.totalorder 1, %s8
    %p164 = scmp.lt.s32.totalorder %s8, 5
    %p165 = pnand %p163, %p164
    %p166 = pneg %p165
    // Predicated region
    $region25: #{tpu_custom_call.1} parent=5 // pred_check
      _
    $region26: #{tpu_custom_call.1} parent=5 // pred_check_branch
      %168 = sbr.rel (%p165) target = $region28
    $region27: #{tpu_custom_call.1} parent=5 // pred_region
      %s169 = ssub.s32 %s8, 1
      %s170 = smul.u32 %s17, 2
      %s171 = sadd.s32 %s170, %s18
      %p172 = scmp.lt.s32.totalorder %s171, 2
      %s173 = scalar_select %p172, %s171, 2
      %p174 = scmp.lt.s32.totalorder %s173, 2
      %s175 = scalar_select %p174, %s173, 2
      %s176 = smul.addr %s175, 8
      %s177 = scalar_lea.vmem %s0, %s176
      %p178 = pneg %p54
      %p179 = pneg %p51
      %s180 = smul.u32 %s17, 2
      %s181 = sadd.s32 %s180, %s18
      %p182 = scmp.lt.s32.totalorder %s181, 2
      %s183 = scalar_select %p182, %s181, 2
      %p184 = scmp.lt.s32.totalorder %s183, 2
      %s185 = scalar_select %p184, %s183, 2
      %s186 = smul.addr %s185, 8
      %s187 = scalar_lea.vmem %s1, %s186
      %p188 = pneg %p88
      %p189 = pneg %p85
      %p190 = pneg %p114
      %p191 = pneg %p111
      %p192 = scmp.lt.s32.totalorder %s17, 1
      %s193 = scalar_select %p192, %s17, 1
      %s194 = scalar_lea.vmem %s2, %s193
      %s195 = smul.u32 %s17, 2
      %s196 = sadd.s32 %s195, %s18
      %p197 = scmp.lt.s32.totalorder %s196, 2
      %s198 = scalar_select %p197, %s196, 2
      %p199 = scmp.lt.s32.totalorder %s198, 2
      %s200 = scalar_select %p199, %s198, 2
      %s201 = smul.addr %s200, 8
      %s202 = scalar_lea.vmem %s0, %s201
      %s203 = smul.u32 %s17, 2
      %s204 = sadd.s32 %s203, %s18
      %p205 = scmp.lt.s32.totalorder %s204, 2
      %s206 = scalar_select %p205, %s204, 2
      %s207 = smul.u32 %s17, 2
      %s208 = sadd.s32 %s207, %s18
      %p209 = scmp.lt.s32.totalorder %s208, 2
      %s210 = scalar_select %p209, %s208, 2
      %p211 = scmp.lt.s32.totalorder %s210, 2
      %s212 = scalar_select %p211, %s210, 2
      %s213 = smul.addr %s212, 8
      %s214 = scalar_lea.vmem %s1, %s213
      %s215 = smul.u32 %s17, 2
      %s216 = sadd.s32 %s215, %s18
      %p217 = scmp.lt.s32.totalorder %s216, 2
      %s218 = scalar_select %p217, %s216, 2
      %p219 = scmp.lt.s32.totalorder %s17, 1
      %s220 = scalar_select %p219, %s17, 1
      %s221 = scalar_lea.vmem %s2, %s220
      %p222 = scmp.eq.s32.totalorder %s18, 0
      // Predicated region
      $region29: #{tpu_custom_call.1} parent=27 // pred_check
        %p223 = pneg %p222
      $region30: #{tpu_custom_call.1} parent=27 // pred_check_branch
        %225 = sbr.rel (%p223) target = $region32
      $region31: #{tpu_custom_call.1} parent=27 // pred_region
        %vm226 = vcmask 7168
        %227 = vst.msk [vmem:[#allocation2] sm:$0xff] %vm226, 0.0
      $region32: #{tpu_custom_call.1} parent=27 // pred_fallthru
        _
      %v228 = vld [vmem:[%s202] sm:$0xff]
      %v229 = vld [vmem:[%s214] sm:$0xff]
      %vm230 = vcmask 261120
      %v231 = vsel %vm230, %v228, -inf
      %232 = vmax.xlane.f32.xlu0 %v231
      %v233 = vpop.xlane.xlu0 %232
      %v234 = vsub.f32 %v228, %v233
      %v235 = vlaneseq
      %v236 = vand.u32 %v235, 127
      %237 = vset.pattern.permute.xlu0 0
      %238 = vperm.xlu0 %237, %v229
      %v239 = vpop.permute.xlu0 %238
      %vm240 = vcmp.eq.s32.totalorder %v236, %v239
      %v241 = vsel %vm240, %v234, 0.0
      %v242 = vsel %vm230, %v241, 0.0
      %243 = vadd.xlane.f32.xlu0 %v242
      %v244 = vpop.xlane.xlu0 %243
      %v245 = vmul.f32 %v234, 1.442695
      %v246 = vpow.pop %v245
      %v247 = vsel %vm230, %v246, 0.0
      %248 = vadd.xlane.f32.xlu0 %v247
      %v249 = vpop.xlane.xlu0 %248
      %v250 = vlog2.pop %v249
      %v251 = vmul.f32 %v250, 0.6931472
      %s252 = smul.u32 %s17, 2
      %s253 = sadd.s32 %s252, %s18
      %s254 = smul.u32 %s253, 8
      %v255 = vlaneseq
      %v256 = vshrl.u32 %v255, 7
      %v257 = vstv %s254
      %v258 = vadd.s32 %v257, %v256
      %vm259 = vcmp.lt.s32.totalorder %v258, 20
      %v260 = vsub.f32 %v251, %v244
      %v261 = vsel %vm259, %v260, 0.0
      %v262 = vld [vmem:[#allocation2] sm:$0xff]
      %v263 = vadd.f32 %v262, %v261
      %vm264 = vcmask 7168
      %265 = vst.msk [vmem:[#allocation2] sm:$0xff] %vm264, %v263
      %p266 = scmp.eq.s32.totalorder %s18, 1
      // Predicated region
      $region33: #{tpu_custom_call.1} parent=27 // pred_check
        %p267 = pneg %p266
      $region34: #{tpu_custom_call.1} parent=27 // pred_check_branch
        %269 = sbr.rel (%p267) target = $region36
      $region35: #{tpu_custom_call.1} parent=27 // pred_region
        %v270 = vld [vmem:[#allocation2] sm:$0xff]
        %v271 = vsel %vm264, %v270, 0.0
        %272 = vadd.xlane.f32.xlu0 %v271
        %v273 = vpop.xlane.xlu0 %272
        %v274 = vrot.slane %v273, 4
        %v275 = vadd.f32 %v273, %v274
        %v276 = vrot.slane %v275, 2
        %v277 = vadd.f32 %v275, %v276
        %v278 = vrot.slane %v277, 1
        %v279 = vadd.f32 %v277, %v278
        %s280 = vtos %v279
        %v281 = vstv %s280
        %v282 = vmul.f32 %v281, 0.05
        %vm283 = vcmask 0
        %284 = vst.msk [vmem:[%s221] sm:$0x1] %vm283, %v282
      $region36: #{tpu_custom_call.1} parent=27 // pred_fallthru
        _
      %p285 = scmp.lt.s32.totalorder %s17, 1
      %s286 = scalar_select %p285, %s17, 1
      %s287 = scalar_lea.vmem %s2, %s286
      // Predicated region
      $region37: #{tpu_custom_call.1} parent=27 // pred_check
        %p288 = pneg %p111
      $region38: #{tpu_custom_call.1} parent=27 // pred_check_branch
        %290 = sbr.rel (%p288) target = $region40
      $region39: #{tpu_custom_call.1} parent=27 // pred_region
        _
      $region40: #{tpu_custom_call.1} parent=27 // pred_fallthru
        _
    $region28: #{tpu_custom_call.1} parent=5 // pred_fallthru
      _
    %p291 = scmp.le.s32.totalorder 2, %s8
    // Predicated region
    $region41: #{tpu_custom_call.1} parent=5 // pred_check
      %p292 = pneg %p291
    $region42: #{tpu_custom_call.1} parent=5 // pred_check_branch
      %294 = sbr.rel (%p292) target = $region44
    $region43: #{tpu_custom_call.1} parent=5 // pred_region
      %s295 = ssub.s32 %s8, 2
      // Predicated region
      $region45: #{tpu_custom_call.1} parent=43 // pred_check
        %p296 = pneg %p117
      $region46: #{tpu_custom_call.1} parent=43 // pred_check_branch
        %298 = sbr.rel (%p296) target = $region48
      $region47: #{tpu_custom_call.1} parent=43 // pred_region
        %p299 = scmp.lt.s32.totalorder %s19, 1
        %s300 = scalar_select %p299, %s19, 1
        %s301 = scalar_lea.vmem %s2, %s300
      $region48: #{tpu_custom_call.1} parent=43 // pred_fallthru
        _
    $region44: #{tpu_custom_call.1} parent=5 // pred_fallthru
      _
  $region6: #{tpu_custom_call.1} parent=0 // loop_footer
    %s12 = sadd.s32 1, %s8
  $region7: #{tpu_custom_call.1} parent=0 // loop_footer_branch
    %7 = sbr.rel target = $region3
  $region8: #{tpu_custom_call.1} parent=0 // loop_exit
    _

</llo_original>
